<compile_context>
chip_gen: v7x
topology: tpu7x:2x2x1
jax: 0.10.0
libtpu: 0.0.40
codegen_flags: <defaults>
</compile_context>

<pallas_src>
import functools
import math

import jax
import jax.numpy as jnp
from jax.experimental import pallas as pl
from jax.experimental.pallas import tpu as pltpu


def _dft_mats(n, sign):
    """Real/imag parts of the n-point DFT matrix exp(sign * 2*pi*i * u*k / n)."""
    k = jnp.arange(n, dtype=jnp.int32)
    kk = (k[:, None] * k[None, :]) % n                  # exact integer phase index
    ang = (sign * 2.0 * jnp.pi / n) * kk.astype(jnp.float32)
    return jnp.cos(ang), jnp.sin(ang)


def _elementwise_dtype():
    """bf16 elementwise (ReLU/tanh) only on chips with native bf16 VPU/EUP (v6e/v7x)."""
    try:
        kind = jax.devices()[0].device_kind.lower()
    except Exception:
        return jnp.float32
    return jnp.bfloat16 if ("v6" in kind or "v7" in kind) else jnp.float32


def fourier_noise_kernel(ew_dtype, xin_ref, fh2_ref, kw_ref, b1_ref, bw2_ref,
                         b2_ref, bgw_ref, gh2_ref, o_ref):
    f32 = jnp.float32
    bf16 = jnp.bfloat16
    H = o_ref.shape[0]
    TNW = o_ref.shape[1]                                 # tn * W (lane width of slab)

    xin = xin_ref[...]                                   # (2H, TNW) f32
    x32 = xin[:H]                                        # column-stacked planes
    # Imaginary-channel term real(ifft2(i*imag(fft2 x))) == (x - circ_flip(x)) / 2,
    # computed exactly in f32 (flip rows are supplied by the wrapper in the same slab).
    corr = 0.5 * (x32 - xin[H:])

    # ---- forward H-DFT: [Ar; Ai] = [fhr; fhi] @ X in one matmul ----
    a = jnp.dot(fh2_ref[...], x32.astype(bf16), preferred_element_type=f32)  # (2H, TNW)
    a_cat = jnp.concatenate([a[:H], a[H:]], axis=1).astype(bf16)             # (H, 2*TNW)

    # ---- forward W-DFT folded into MLP layer 1; real/imag pair fused (one matmul) ----
    h1 = jnp.dot(a_cat, kw_ref[...], preferred_element_type=f32) + b1_ref[...]
    h1 = jnp.maximum(h1.astype(ew_dtype), 0.0)           # ReLU

    # ---- MLP layer 2 + tanh ----
    z = jnp.dot(h1.astype(bf16), bw2_ref[...], preferred_element_type=f32) + b2_ref[...]
    zr = jnp.tanh(z.astype(ew_dtype))                    # (H, TNW)

    # ---- inverse W-DFT: [Br | Bi] = Zr @ [I(x)gwr | I(x)gwi] in one matmul ----
    b = jnp.dot(zr.astype(bf16), bgw_ref[...], preferred_element_type=f32)   # (H, 2*TNW)
    bs = jnp.concatenate([b[:, :TNW], b[:, TNW:]], axis=0).astype(bf16)      # (2H, TNW)

    # ---- inverse H-DFT real part, real/imag fused; 1/(H*W) folded into gh2 ----
    cr = jnp.dot(gh2_ref[...], bs, preferred_element_type=f32)               # (H, TNW)

    o_ref[...] = (cr + corr).astype(o_ref.dtype)


@jax.jit
def fourier_noise(x, w1, b1, w2, b2):
    """x: (B, C, H, W); w1: (hidden, W), b1: (hidden,), w2: (W, hidden), b2: (W,)."""
    B, C, H, W = x.shape
    N = B * C
    hidden = w1.shape[0]
    f32, bf16 = jnp.float32, jnp.bfloat16

    # ---- tile selection: tn planes per grid step, tn*W always a multiple of 128 ----
    tn_unit = 128 // math.gcd(W, 128)                 # smallest tn with tn*W % 128 == 0
    n_pad = ((N + tn_unit - 1) // tn_unit) * tn_unit  # pad plane count with zero planes
    lane_budget = max(256, tn_unit * W)               # cap kron-weight size / MXU waste
    cands = [t for t in range(tn_unit, n_pad + 1, tn_unit)
             if n_pad % t == 0 and t * W <= lane_budget]
    multi = [t for t in cands if n_pad // t >= 2]     # prefer >=2 grid steps (v7x / DMA)
    tn = max(multi) if multi else max(cands)
    tnw = tn * W
    grid = (n_pad // tn,)
    # TODO(synk): for W >= 128 switch the kron block-diagonal W-axis weights to true
    # per-plane right-multiplies (fori_loop over pl.ds slices) to avoid tn-fold zero MACs.

    # ---- single wrapper layout pass: [x_cols ; circ_flip_cols] as one f32 slab ----
    xp = jnp.asarray(x, f32).reshape(N, H, W)
    if n_pad > N:
        xp = jnp.concatenate([xp, jnp.zeros((n_pad - N, H, W), f32)], axis=0)
    x_flip = jnp.roll(xp[:, ::-1, ::-1], shift=(1, 1), axis=(1, 2))   # x[(-h)%H, (-w)%W]
    x_cols = xp.transpose(1, 0, 2).reshape(H, n_pad * W)
    flip_cols = x_flip.transpose(1, 0, 2).reshape(H, n_pad * W)
    xin = jnp.concatenate([x_cols, flip_cols], axis=0)                # (2H, n_pad*W) f32

    # ---- constants: DFT matrices + MLP weights, forward W-DFT folded into layer 1 ----
    fhr, fhi = _dft_mats(H, -1.0)
    fwr, fwi = _dft_mats(W, -1.0)
    ghr, ghi = _dft_mats(H, +1.0)
    gwr, gwi = _dft_mats(W, +1.0)
    scale = 1.0 / float(H * W)

    w1f = jnp.asarray(w1, f32)
    w2f = jnp.asarray(w2, f32)
    eye = jnp.eye(tn, dtype=f32)

    fh2 = jnp.concatenate([fhr, fhi], axis=0).astype(bf16)            # (2H, H)
    k1 = fwr @ w1f.T                                                  # (W, hidden) f32
    k2 = fwi @ w1f.T
    kw = jnp.concatenate([jnp.kron(eye, k1), -jnp.kron(eye, k2)],
                         axis=0).astype(bf16)                         # (2*tnw, tn*hidden)
    bw2 = jnp.kron(eye, w2f.T).astype(bf16)                           # (tn*hidden, tnw)
    b1t = jnp.tile(jnp.asarray(b1, f32), tn).reshape(1, -1)           # (1, tn*hidden)
    b2t = jnp.tile(jnp.asarray(b2, f32), tn).reshape(1, -1)           # (1, tnw)
    bgw = jnp.concatenate([jnp.kron(eye, gwr), jnp.kron(eye, gwi)],
                          axis=1).astype(bf16)                        # (tnw, 2*tnw)
    gh2 = (scale * jnp.concatenate([ghr, -ghi], axis=1)).astype(bf16) # (H, 2H)

    consts = (fh2, kw, b1t, bw2, b2t, bgw, gh2)

    # ---- VMEM budget with headroom (v7x: 64 MiB physical / 32 MiB scoped default) ----
    est = ((fh2.size + kw.size + bw2.size + bgw.size + gh2.size) * 2
           + (b1t.size + b2t.size) * 4
           + 2 * (2 * H * tnw) * 4          # double-buffered input slab
           + 2 * (H * tnw) * 4)             # double-buffered output slab
    vmem_limit = int(min(64 * 2**20, max(16 * 2**20, 4 * est)))

    ew_dtype = _elementwise_dtype()
    kernel = functools.partial(fourier_noise_kernel, ew_dtype)

    data_spec = pl.BlockSpec((2 * H, tnw), lambda i: (0, i))
    out_spec = pl.BlockSpec((H, tnw), lambda i: (0, i))
    const_specs = [pl.BlockSpec(a.shape, lambda i: (0, 0)) for a in consts]

    out_cols = pl.pallas_call(
        kernel,
        out_shape=jax.ShapeDtypeStruct((H, n_pad * W), f32),
        grid=grid,
        in_specs=[data_spec] + const_specs,
        out_specs=out_spec,
        compiler_params=pltpu.CompilerParams(
            dimension_semantics=("parallel",),
            vmem_limit_bytes=vmem_limit),
    )(xin, *consts)

    out = out_cols.reshape(H, n_pad, W)[:, :N, :].transpose(1, 0, 2)
    return out.reshape(B, C, H, W)


def fourier_noise_reference(x, w1, b1, w2, b2):
    """Pure-JAX reference mirroring the PyTorch forward exactly."""
    x_freq = jnp.fft.fft2(x)
    real_part = jnp.real(x_freq)
    imag_part = jnp.imag(x_freq)
    h = jnp.maximum(real_part @ w1.T + b1, 0.0)
    real_mod = jnp.tanh(h @ w2.T + b2)
    x_freq_mod = real_mod + 1j * imag_part
    return jnp.real(jnp.fft.ifft2(x_freq_mod))


if __name__ == "__main__":
    # Small shapes consistent with the module: NCHW, num_of_vars == W == 16, hidden == 32.
    B, C, H, W = 2, 4, 16, 16
    hidden = 32
    num_of_vars = W

    key = jax.random.PRNGKey(0)
    kx, k1, k2, k3, k4 = jax.random.split(key, 5)

    x = jax.random.normal(kx, (B, C, H, W), dtype=jnp.float32)

    # Deterministic init mimicking nn.Linear default (uniform in +-1/sqrt(fan_in)).
    bound1 = 1.0 / jnp.sqrt(jnp.float32(num_of_vars))
    bound2 = 1.0 / jnp.sqrt(jnp.float32(hidden))
    w1 = jax.random.uniform(k1, (hidden, num_of_vars), jnp.float32, -bound1, bound1)
    b1 = jax.random.uniform(k2, (hidden,), jnp.float32, -bound1, bound1)
    w2 = jax.random.uniform(k3, (num_of_vars, hidden), jnp.float32, -bound2, bound2)
    b2 = jax.random.uniform(k4, (num_of_vars,), jnp.float32, -bound2, bound2)

    out = jax.block_until_ready(fourier_noise(x, w1, b1, w2, b2))
    ref = jax.block_until_ready(fourier_noise_reference(x, w1, b1, w2, b2))

    assert out.shape == (B, C, H, W)
    # bf16 MXU (f32 accumulation) tolerance; imaginary channel is exact in f32.
    max_err = float(jnp.max(jnp.abs(out - ref)))
    assert max_err < 2e-2, f"max abs error {max_err}"
    print("KERNEL_OK")
</pallas_src>

<mosaic_0001>
module attributes {stable_mosaic.version = 11 : i64} {
  func.func @fourier_noise_kernel(%arg0: i32, %arg1: memref<32x128xf32, #tpu.memory_space<vmem>>, %arg2: memref<32x16xbf16, #tpu.memory_space<vmem>>, %arg3: memref<256x256xbf16, #tpu.memory_space<vmem>>, %arg4: memref<1x256xf32, #tpu.memory_space<vmem>>, %arg5: memref<256x128xbf16, #tpu.memory_space<vmem>>, %arg6: memref<1x128xf32, #tpu.memory_space<vmem>>, %arg7: memref<128x256xbf16, #tpu.memory_space<vmem>>, %arg8: memref<16x32xbf16, #tpu.memory_space<vmem>>, %arg9: memref<16x128xf32, #tpu.memory_space<vmem>>) attributes {dimension_semantics = [#tpu.dimension_semantics<parallel>], iteration_bounds = array<i64: 1>, scalar_prefetch = 0 : i64, scratch_operands = 0 : i64, tpu.core_type = #tpu.core_type<tc>, window_params = [{transform_indices = @transform_0, window_bounds = array<i64: 32, 128>}, {pipeline_mode = #tpu.pipeline_mode<synchronous>, transform_indices = @transform_1, window_bounds = array<i64: 32, 16>}, {pipeline_mode = #tpu.pipeline_mode<synchronous>, transform_indices = @transform_2, window_bounds = array<i64: 256, 256>}, {pipeline_mode = #tpu.pipeline_mode<synchronous>, transform_indices = @transform_3, window_bounds = array<i64: 1, 256>}, {pipeline_mode = #tpu.pipeline_mode<synchronous>, transform_indices = @transform_4, window_bounds = array<i64: 256, 128>}, {pipeline_mode = #tpu.pipeline_mode<synchronous>, transform_indices = @transform_5, window_bounds = array<i64: 1, 128>}, {pipeline_mode = #tpu.pipeline_mode<synchronous>, transform_indices = @transform_6, window_bounds = array<i64: 128, 256>}, {pipeline_mode = #tpu.pipeline_mode<synchronous>, transform_indices = @transform_7, window_bounds = array<i64: 16, 32>}, {transform_indices = @transform_8, window_bounds = array<i64: 16, 128>}]} {
    %c0 = arith.constant 0 : index
    %c0_0 = arith.constant 0 : index
    %0 = vector.load %arg1[%c0, %c0_0] : memref<32x128xf32, #tpu.memory_space<vmem>>, vector<32x128xf32>
    %1 = vector.extract_strided_slice %0 {offsets = [0, 0], sizes = [16, 128], strides = [1, 1]} : vector<32x128xf32> to vector<16x128xf32>
    %2 = vector.extract_strided_slice %0 {offsets = [16, 0], sizes = [16, 128], strides = [1, 1]} : vector<32x128xf32> to vector<16x128xf32>
    %3 = arith.subf %1, %2 : vector<16x128xf32>
    %cst = arith.constant 5.000000e-01 : f32
    %4 = vector.broadcast %cst : f32 to vector<16x128xf32>
    %5 = arith.mulf %4, %3 : vector<16x128xf32>
    %c0_1 = arith.constant 0 : index
    %c0_2 = arith.constant 0 : index
    %6 = vector.load %arg2[%c0_1, %c0_2] : memref<32x16xbf16, #tpu.memory_space<vmem>>, vector<32x16xbf16>
    %7 = arith.truncf %1 : vector<16x128xf32> to vector<16x128xbf16>
    %cst_3 = arith.constant dense<0.000000e+00> : vector<32x128xf32>
    %8 = tpu.matmul %6, %7, %cst_3 {dimension_numbers = #tpu.dot_dimension_numbers<[1], [0], [0], [1], [0, 0, 1, 1], [], []>} : vector<32x16xbf16>, vector<16x128xbf16>, vector<32x128xf32> -> vector<32x128xf32>
    %9 = vector.extract_strided_slice %8 {offsets = [0, 0], sizes = [16, 128], strides = [1, 1]} : vector<32x128xf32> to vector<16x128xf32>
    %10 = vector.extract_strided_slice %8 {offsets = [16, 0], sizes = [16, 128], strides = [1, 1]} : vector<32x128xf32> to vector<16x128xf32>
    %11 = tpu.concatenate %9, %10 in 1 : vector<16x128xf32>, vector<16x128xf32> -> vector<16x256xf32>
    %12 = arith.truncf %11 : vector<16x256xf32> to vector<16x256xbf16>
    %c0_4 = arith.constant 0 : index
    %c0_5 = arith.constant 0 : index
    %13 = vector.load %arg3[%c0_4, %c0_5] : memref<256x256xbf16, #tpu.memory_space<vmem>>, vector<256x256xbf16>
    %cst_6 = arith.constant dense<0.000000e+00> : vector<16x256xf32>
    %14 = tpu.matmul %12, %13, %cst_6 {dimension_numbers = #tpu.dot_dimension_numbers<[1], [0], [0], [1], [0, 0, 1, 1], [], []>} : vector<16x256xbf16>, vector<256x256xbf16>, vector<16x256xf32> -> vector<16x256xf32>
    %c0_7 = arith.constant 0 : index
    %c0_8 = arith.constant 0 : index
    %15 = vector.load %arg4[%c0_7, %c0_8] : memref<1x256xf32, #tpu.memory_space<vmem>>, vector<1x256xf32>
    %16 = vector.broadcast %15 : vector<1x256xf32> to vector<16x256xf32>
    %17 = arith.addf %14, %16 : vector<16x256xf32>
    %cst_9 = arith.constant 0.000000e+00 : f32
    %18 = vector.broadcast %cst_9 : f32 to vector<16x256xf32>
    %19 = arith.maximumf %17, %18 : vector<16x256xf32>
    %20 = arith.truncf %19 : vector<16x256xf32> to vector<16x256xbf16>
    %c0_10 = arith.constant 0 : index
    %c0_11 = arith.constant 0 : index
    %21 = vector.load %arg5[%c0_10, %c0_11] : memref<256x128xbf16, #tpu.memory_space<vmem>>, vector<256x128xbf16>
    %cst_12 = arith.constant dense<0.000000e+00> : vector<16x128xf32>
    %22 = tpu.matmul %20, %21, %cst_12 {dimension_numbers = #tpu.dot_dimension_numbers<[1], [0], [0], [1], [0, 0, 1, 1], [], []>} : vector<16x256xbf16>, vector<256x128xbf16>, vector<16x128xf32> -> vector<16x128xf32>
    %c0_13 = arith.constant 0 : index
    %c0_14 = arith.constant 0 : index
    %23 = vector.load %arg6[%c0_13, %c0_14] : memref<1x128xf32, #tpu.memory_space<vmem>>, vector<1x128xf32>
    %24 = vector.broadcast %23 : vector<1x128xf32> to vector<16x128xf32>
    %25 = arith.addf %22, %24 : vector<16x128xf32>
    %26 = math.tanh %25 : vector<16x128xf32>
    %27 = arith.truncf %26 : vector<16x128xf32> to vector<16x128xbf16>
    %c0_15 = arith.constant 0 : index
    %c0_16 = arith.constant 0 : index
    %28 = vector.load %arg7[%c0_15, %c0_16] : memref<128x256xbf16, #tpu.memory_space<vmem>>, vector<128x256xbf16>
    %cst_17 = arith.constant dense<0.000000e+00> : vector<16x256xf32>
    %29 = tpu.matmul %27, %28, %cst_17 {dimension_numbers = #tpu.dot_dimension_numbers<[1], [0], [0], [1], [0, 0, 1, 1], [], []>} : vector<16x128xbf16>, vector<128x256xbf16>, vector<16x256xf32> -> vector<16x256xf32>
    %30 = vector.extract_strided_slice %29 {offsets = [0, 0], sizes = [16, 128], strides = [1, 1]} : vector<16x256xf32> to vector<16x128xf32>
    %31 = vector.extract_strided_slice %29 {offsets = [0, 128], sizes = [16, 128], strides = [1, 1]} : vector<16x256xf32> to vector<16x128xf32>
    %32 = tpu.concatenate %30, %31 in 0 : vector<16x128xf32>, vector<16x128xf32> -> vector<32x128xf32>
    %33 = arith.truncf %32 : vector<32x128xf32> to vector<32x128xbf16>
    %c0_18 = arith.constant 0 : index
    %c0_19 = arith.constant 0 : index
    %34 = vector.load %arg8[%c0_18, %c0_19] : memref<16x32xbf16, #tpu.memory_space<vmem>>, vector<16x32xbf16>
    %cst_20 = arith.constant dense<0.000000e+00> : vector<16x128xf32>
    %35 = tpu.matmul %34, %33, %cst_20 {dimension_numbers = #tpu.dot_dimension_numbers<[1], [0], [0], [1], [0, 0, 1, 1], [], []>} : vector<16x32xbf16>, vector<32x128xbf16>, vector<16x128xf32> -> vector<16x128xf32>
    %36 = arith.addf %35, %5 : vector<16x128xf32>
    %c0_21 = arith.constant 0 : index
    %c0_22 = arith.constant 0 : index
    %37 = vector.load %arg9[%c0_21, %c0_22] : memref<16x128xf32, #tpu.memory_space<vmem>>, vector<16x128xf32>
    tpu.vector_store %arg9[%c0_21, %c0_22], %36 {strides = array<i32>} : memref<16x128xf32, #tpu.memory_space<vmem>>, vector<16x128xf32>,
    return
  }
  func.func @transform_0(%arg0: i32) -> (i32, i32) {
    %c0_i32 = arith.constant 0 : i32
    %c0_i32_0 = arith.constant 0 : i32
    return %c0_i32, %arg0 : i32, i32
  }
  func.func @transform_1(%arg0: i32) -> (i32, i32) {
    %c0_i32 = arith.constant 0 : i32
    %c0_i32_0 = arith.constant 0 : i32
    %c0_i32_1 = arith.constant 0 : i32
    return %c0_i32, %c0_i32_0 : i32, i32
  }
  func.func @transform_2(%arg0: i32) -> (i32, i32) {
    %c0_i32 = arith.constant 0 : i32
    %c0_i32_0 = arith.constant 0 : i32
    %c0_i32_1 = arith.constant 0 : i32
    return %c0_i32, %c0_i32_0 : i32, i32
  }
  func.func @transform_3(%arg0: i32) -> (i32, i32) {
    %c0_i32 = arith.constant 0 : i32
    %c0_i32_0 = arith.constant 0 : i32
    %c0_i32_1 = arith.constant 0 : i32
    return %c0_i32, %c0_i32_0 : i32, i32
  }
  func.func @transform_4(%arg0: i32) -> (i32, i32) {
    %c0_i32 = arith.constant 0 : i32
    %c0_i32_0 = arith.constant 0 : i32
    %c0_i32_1 = arith.constant 0 : i32
    return %c0_i32, %c0_i32_0 : i32, i32
  }
  func.func @transform_5(%arg0: i32) -> (i32, i32) {
    %c0_i32 = arith.constant 0 : i32
    %c0_i32_0 = arith.constant 0 : i32
    %c0_i32_1 = arith.constant 0 : i32
    return %c0_i32, %c0_i32_0 : i32, i32
  }
  func.func @transform_6(%arg0: i32) -> (i32, i32) {
    %c0_i32 = arith.constant 0 : i32
    %c0_i32_0 = arith.constant 0 : i32
    %c0_i32_1 = arith.constant 0 : i32
    return %c0_i32, %c0_i32_0 : i32, i32
  }
  func.func @transform_7(%arg0: i32) -> (i32, i32) {
    %c0_i32 = arith.constant 0 : i32
    %c0_i32_0 = arith.constant 0 : i32
    %c0_i32_1 = arith.constant 0 : i32
    return %c0_i32, %c0_i32_0 : i32, i32
  }
  func.func @transform_8(%arg0: i32) -> (i32, i32) {
    %c0_i32 = arith.constant 0 : i32
    %c0_i32_0 = arith.constant 0 : i32
    return %c0_i32, %arg0 : i32, i32
  }
}

</mosaic_0001>

<llo_original>
// kernel: reverse.1
$region0: #{reverse.1}
  %s0 = inlined_call_operand.vmem [shape: f32[8,15,16], index: 0, kind: input, shape index: {}]
  %s1 = inlined_call_operand.vmem [shape: f32[8,15,16], index: 1, kind: output, shape index: {}]
  %v2 = vlaneseq
  %v3 = vsub.s32 15, %v2
  %4 = vset.pattern.permute.xlu0 %v3
  $region1: #{reverse.1} parent=0
    #allocation0 [shape = 'u8[61440]{0}', space=vmem, size = 0xf000, scoped, tag = 'operand span for operand 0']
    #allocation1 [shape = 'u8[61440]{0}', space=vmem, size = 0xf000, scoped, tag = 'operand span for operand 1']
    // Predicated region
    $region2: #{reverse.1} parent=1 // pred_check
      _
    $region3: #{reverse.1} parent=1 // pred_check_branch
      %6 = sbr.rel (0) target = $region5
    $region4: #{reverse.1} parent=1 // pred_region
      // Predicated region
      $region6: #{reverse.1} parent=4 // pred_check
        _
      $region7: #{reverse.1} parent=4 // pred_check_branch
        %8 = sbr.rel (0) target = $region9
      $region8: #{reverse.1} parent=4 // pred_region
        // Predicated region
        $region21: #{reverse.1} parent=8 // pred_check
          _
        $region22: #{reverse.1} parent=8 // pred_check_branch
          %51 = sbr.rel (0) target = $region24
        $region23: #{reverse.1} parent=8 // pred_region
          loop: start=0, step=1, limit=1
          $region25: #{reverse.1} parent=23 // loop_pre_header
            _
          $region26: #{reverse.1} parent=23 // loop_header
            %s53 = sphi 0, %s57
            %p54 = scmp.ge.s32.totalorder %s53, 1
            %s58 = sphi %s0, %s0
            %s59 = sphi [#allocation0], [#allocation0]
          $region27: #{reverse.1} parent=23 // loop_header_branch
            %56 = sbr.rel (%p54) target = $region31
          $region28: #{reverse.1} parent=23 // loop_body
            %v60 = vld [vmem:[%s58] sm:$0xff]
            %61 = vst [vmem:[%s59] sm:$0xff] %v60
            %v62 = vld [vmem:[%s58 + $0x8] sm:$0xff]
            %63 = vst [vmem:[%s59 + $0x8] sm:$0xff] %v62
            %v64 = vld [vmem:[%s58 + $0x10] sm:$0xff]
            %65 = vst [vmem:[%s59 + $0x10] sm:$0xff] %v64
            %v66 = vld [vmem:[%s58 + $0x18] sm:$0xff]
            %67 = vst [vmem:[%s59 + $0x18] sm:$0xff] %v66
            %v68 = vld [vmem:[%s58 + $0x20] sm:$0xff]
            %69 = vst [vmem:[%s59 + $0x20] sm:$0xff] %v68
            %v70 = vld [vmem:[%s58 + $0x28] sm:$0xff]
            %71 = vst [vmem:[%s59 + $0x28] sm:$0xff] %v70
            %v72 = vld [vmem:[%s58 + $0x30] sm:$0xff]
            %73 = vst [vmem:[%s59 + $0x30] sm:$0xff] %v72
            %v74 = vld [vmem:[%s58 + $0x38] sm:$0xff]
            %75 = vst [vmem:[%s59 + $0x38] sm:$0xff] %v74
            %v76 = vld [vmem:[%s58 + $0x40] sm:$0xff]
            %77 = vst [vmem:[%s59 + $0x40] sm:$0xff] %v76
            %v78 = vld [vmem:[%s58 + $0x48] sm:$0xff]
            %79 = vst [vmem:[%s59 + $0x48] sm:$0xff] %v78
            %v80 = vld [vmem:[%s58 + $0x50] sm:$0xff]
            %81 = vst [vmem:[%s59 + $0x50] sm:$0xff] %v80
            %v82 = vld [vmem:[%s58 + $0x58] sm:$0xff]
            %83 = vst [vmem:[%s59 + $0x58] sm:$0xff] %v82
            %v84 = vld [vmem:[%s58 + $0x60] sm:$0xff]
            %85 = vst [vmem:[%s59 + $0x60] sm:$0xff] %v84
            %v86 = vld [vmem:[%s58 + $0x68] sm:$0xff]
            %87 = vst [vmem:[%s59 + $0x68] sm:$0xff] %v86
            %v88 = vld [vmem:[%s58 + $0x70] sm:$0xff]
            %89 = vst [vmem:[%s59 + $0x70] sm:$0xff] %v88
          $region29: #{reverse.1} parent=23 // loop_footer
            %s57 = sadd.s32 1, %s53
          $region30: #{reverse.1} parent=23 // loop_footer_branch
            %52 = sbr.rel target = $region26
          $region31: #{reverse.1} parent=23 // loop_exit
            _
        $region24: #{reverse.1} parent=8 // pred_fallthru
          _
        // Predicated region
        $region32: #{reverse.1} parent=8 // pred_check
          _
        $region33: #{reverse.1} parent=8 // pred_check_branch
          %91 = sbr.rel target = $region35
        $region34: #{reverse.1} parent=8 // pred_region
          _
        $region35: #{reverse.1} parent=8 // pred_fallthru
          _
      $region9: #{reverse.1} parent=4 // pred_fallthru
        _
      // Predicated region
      $region10: #{reverse.1} parent=4 // pred_check
        _
      $region11: #{reverse.1} parent=4 // pred_check_branch
        %10 = sbr.rel target = $region13
      $region12: #{reverse.1} parent=4 // pred_region
        loop: start=0, step=1, limit=1
        $region14: #{reverse.1} parent=12 // loop_pre_header
          _
        $region15: #{reverse.1} parent=12 // loop_header
          %s13 = sphi 0, %s17
          %p14 = scmp.ge.s32.totalorder %s13, 1
          %s18 = sphi %s0, %s0
          %s19 = sphi [#allocation0], [#allocation0]
        $region16: #{reverse.1} parent=12 // loop_header_branch
          %16 = sbr.rel (%p14) target = $region20
        $region17: #{reverse.1} parent=12 // loop_body
          %v20 = vld [vmem:[%s18] sm:$0xff]
          %21 = vst [vmem:[%s19] sm:$0xff] %v20
          %v22 = vld [vmem:[%s18 + $0x8] sm:$0xff]
          %23 = vst [vmem:[%s19 + $0x8] sm:$0xff] %v22
          %v24 = vld [vmem:[%s18 + $0x10] sm:$0xff]
          %25 = vst [vmem:[%s19 + $0x10] sm:$0xff] %v24
          %v26 = vld [vmem:[%s18 + $0x18] sm:$0xff]
          %27 = vst [vmem:[%s19 + $0x18] sm:$0xff] %v26
          %v28 = vld [vmem:[%s18 + $0x20] sm:$0xff]
          %29 = vst [vmem:[%s19 + $0x20] sm:$0xff] %v28
          %v30 = vld [vmem:[%s18 + $0x28] sm:$0xff]
          %31 = vst [vmem:[%s19 + $0x28] sm:$0xff] %v30
          %v32 = vld [vmem:[%s18 + $0x30] sm:$0xff]
          %33 = vst [vmem:[%s19 + $0x30] sm:$0xff] %v32
          %v34 = vld [vmem:[%s18 + $0x38] sm:$0xff]
          %35 = vst [vmem:[%s19 + $0x38] sm:$0xff] %v34
          %v36 = vld [vmem:[%s18 + $0x40] sm:$0xff]
          %37 = vst [vmem:[%s19 + $0x40] sm:$0xff] %v36
          %v38 = vld [vmem:[%s18 + $0x48] sm:$0xff]
          %39 = vst [vmem:[%s19 + $0x48] sm:$0xff] %v38
          %v40 = vld [vmem:[%s18 + $0x50] sm:$0xff]
          %41 = vst [vmem:[%s19 + $0x50] sm:$0xff] %v40
          %v42 = vld [vmem:[%s18 + $0x58] sm:$0xff]
          %43 = vst [vmem:[%s19 + $0x58] sm:$0xff] %v42
          %v44 = vld [vmem:[%s18 + $0x60] sm:$0xff]
          %45 = vst [vmem:[%s19 + $0x60] sm:$0xff] %v44
          %v46 = vld [vmem:[%s18 + $0x68] sm:$0xff]
          %47 = vst [vmem:[%s19 + $0x68] sm:$0xff] %v46
          %v48 = vld [vmem:[%s18 + $0x70] sm:$0xff]
          %49 = vst [vmem:[%s19 + $0x70] sm:$0xff] %v48
        $region18: #{reverse.1} parent=12 // loop_footer
          %s17 = sadd.s32 1, %s13
        $region19: #{reverse.1} parent=12 // loop_footer_branch
          %12 = sbr.rel target = $region15
        $region20: #{reverse.1} parent=12 // loop_exit
          _
      $region13: #{reverse.1} parent=4 // pred_fallthru
        _
    $region5: #{reverse.1} parent=1 // pred_fallthru
      _
    %92 = vnop
    %s93 = scalar_lea.vmem [#allocation0], 112
    %v94 = vld [vmem:[%s93] sm:$0xff]
    %95 = vperm.xlu0 %4, %v94
    %v96 = vpop.permute.xlu0 %95
    %97 = vst [vmem:[#allocation1] sm:$0xff] %v96
    %s98 = scalar_lea.vmem [#allocation1], 8
    %s99 = scalar_lea.vmem [#allocation0], 104
    %v100 = vld [vmem:[%s99] sm:$0xff]
    %101 = vperm.xlu0 %4, %v100
    %v102 = vpop.permute.xlu0 %101
    %103 = vst [vmem:[%s98] sm:$0xff] %v102
    %s104 = scalar_lea.vmem [#allocation1], 16
    %s105 = scalar_lea.vmem [#allocation0], 96
    %v106 = vld [vmem:[%s105] sm:$0xff]
    %107 = vperm.xlu0 %4, %v106
    %v108 = vpop.permute.xlu0 %107
    %109 = vst [vmem:[%s104] sm:$0xff] %v108
    %s110 = scalar_lea.vmem [#allocation1], 24
    %s111 = scalar_lea.vmem [#allocation0], 88
    %v112 = vld [vmem:[%s111] sm:$0xff]
    %113 = vperm.xlu0 %4, %v112
    %v114 = vpop.permute.xlu0 %113
    %115 = vst [vmem:[%s110] sm:$0xff] %v114
    %s116 = scalar_lea.vmem [#allocation1], 32
    %s117 = scalar_lea.vmem [#allocation0], 80
    %v118 = vld [vmem:[%s117] sm:$0xff]
    %119 = vperm.xlu0 %4, %v118
    %v120 = vpop.permute.xlu0 %119
    %121 = vst [vmem:[%s116] sm:$0xff] %v120
    %s122 = scalar_lea.vmem [#allocation1], 40
    %s123 = scalar_lea.vmem [#allocation0], 72
    %v124 = vld [vmem:[%s123] sm:$0xff]
    %125 = vperm.xlu0 %4, %v124
    %v126 = vpop.permute.xlu0 %125
    %127 = vst [vmem:[%s122] sm:$0xff] %v126
    %s128 = scalar_lea.vmem [#allocation1], 48
    %s129 = scalar_lea.vmem [#allocation0], 64
    %v130 = vld [vmem:[%s129] sm:$0xff]
    %131 = vperm.xlu0 %4, %v130
    %v132 = vpop.permute.xlu0 %131
    %133 = vst [vmem:[%s128] sm:$0xff] %v132
    %s134 = scalar_lea.vmem [#allocation1], 56
    %s135 = scalar_lea.vmem [#allocation0], 56
    %v136 = vld [vmem:[%s135] sm:$0xff]
    %137 = vperm.xlu0 %4, %v136
    %v138 = vpop.permute.xlu0 %137
    %139 = vst [vmem:[%s134] sm:$0xff] %v138
    %s140 = scalar_lea.vmem [#allocation1], 64
    %s141 = scalar_lea.vmem [#allocation0], 48
    %v142 = vld [vmem:[%s141] sm:$0xff]
    %143 = vperm.xlu0 %4, %v142
    %v144 = vpop.permute.xlu0 %143
    %145 = vst [vmem:[%s140] sm:$0xff] %v144
    %s146 = scalar_lea.vmem [#allocation1], 72
    %s147 = scalar_lea.vmem [#allocation0], 40
    %v148 = vld [vmem:[%s147] sm:$0xff]
    %149 = vperm.xlu0 %4, %v148
    %v150 = vpop.permute.xlu0 %149
    %151 = vst [vmem:[%s146] sm:$0xff] %v150
    %s152 = scalar_lea.vmem [#allocation1], 80
    %s153 = scalar_lea.vmem [#allocation0], 32
    %v154 = vld [vmem:[%s153] sm:$0xff]
    %155 = vperm.xlu0 %4, %v154
    %v156 = vpop.permute.xlu0 %155
    %157 = vst [vmem:[%s152] sm:$0xff] %v156
    %s158 = scalar_lea.vmem [#allocation1], 88
    %s159 = scalar_lea.vmem [#allocation0], 24
    %v160 = vld [vmem:[%s159] sm:$0xff]
    %161 = vperm.xlu0 %4, %v160
    %v162 = vpop.permute.xlu0 %161
    %163 = vst [vmem:[%s158] sm:$0xff] %v162
    %s164 = scalar_lea.vmem [#allocation1], 96
    %s165 = scalar_lea.vmem [#allocation0], 16
    %v166 = vld [vmem:[%s165] sm:$0xff]
    %167 = vperm.xlu0 %4, %v166
    %v168 = vpop.permute.xlu0 %167
    %169 = vst [vmem:[%s164] sm:$0xff] %v168
    %s170 = scalar_lea.vmem [#allocation1], 104
    %s171 = scalar_lea.vmem [#allocation0], 8
    %v172 = vld [vmem:[%s171] sm:$0xff]
    %173 = vperm.xlu0 %4, %v172
    %v174 = vpop.permute.xlu0 %173
    %175 = vst [vmem:[%s170] sm:$0xff] %v174
    %s176 = scalar_lea.vmem [#allocation1], 112
    %v177 = vld [vmem:[#allocation0] sm:$0xff]
    %178 = vperm.xlu0 %4, %v177
    %v179 = vpop.permute.xlu0 %178
    %180 = vst [vmem:[%s176] sm:$0xff] %v179
    // Predicated region
    $region36: #{reverse.1} parent=1 // pred_check
      _
    $region37: #{reverse.1} parent=1 // pred_check_branch
      %182 = sbr.rel (0) target = $region39
    $region38: #{reverse.1} parent=1 // pred_region
      // Predicated region
      $region40: #{reverse.1} parent=38 // pred_check
        _
      $region41: #{reverse.1} parent=38 // pred_check_branch
        %184 = sbr.rel (0) target = $region43
      $region42: #{reverse.1} parent=38 // pred_region
        // Predicated region
        $region55: #{reverse.1} parent=42 // pred_check
          _
        $region56: #{reverse.1} parent=42 // pred_check_branch
          %227 = sbr.rel (0) target = $region58
        $region57: #{reverse.1} parent=42 // pred_region
          loop: start=0, step=1, limit=1
          $region59: #{reverse.1} parent=57 // loop_pre_header
            _
          $region60: #{reverse.1} parent=57 // loop_header
            %s229 = sphi 0, %s233
            %p230 = scmp.ge.s32.totalorder %s229, 1
            %s234 = sphi [#allocation1], [#allocation1]
            %s235 = sphi %s1, %s1
          $region61: #{reverse.1} parent=57 // loop_header_branch
            %232 = sbr.rel (%p230) target = $region65
          $region62: #{reverse.1} parent=57 // loop_body
            %v236 = vld [vmem:[%s234] sm:$0xff]
            %237 = vst [vmem:[%s235] sm:$0xff] %v236
            %v238 = vld [vmem:[%s234 + $0x8] sm:$0xff]
            %239 = vst [vmem:[%s235 + $0x8] sm:$0xff] %v238
            %v240 = vld [vmem:[%s234 + $0x10] sm:$0xff]
            %241 = vst [vmem:[%s235 + $0x10] sm:$0xff] %v240
            %v242 = vld [vmem:[%s234 + $0x18] sm:$0xff]
            %243 = vst [vmem:[%s235 + $0x18] sm:$0xff] %v242
            %v244 = vld [vmem:[%s234 + $0x20] sm:$0xff]
            %245 = vst [vmem:[%s235 + $0x20] sm:$0xff] %v244
            %v246 = vld [vmem:[%s234 + $0x28] sm:$0xff]
            %247 = vst [vmem:[%s235 + $0x28] sm:$0xff] %v246
            %v248 = vld [vmem:[%s234 + $0x30] sm:$0xff]
            %249 = vst [vmem:[%s235 + $0x30] sm:$0xff] %v248
            %v250 = vld [vmem:[%s234 + $0x38] sm:$0xff]
            %251 = vst [vmem:[%s235 + $0x38] sm:$0xff] %v250
            %v252 = vld [vmem:[%s234 + $0x40] sm:$0xff]
            %253 = vst [vmem:[%s235 + $0x40] sm:$0xff] %v252
            %v254 = vld [vmem:[%s234 + $0x48] sm:$0xff]
            %255 = vst [vmem:[%s235 + $0x48] sm:$0xff] %v254
            %v256 = vld [vmem:[%s234 + $0x50] sm:$0xff]
            %257 = vst [vmem:[%s235 + $0x50] sm:$0xff] %v256
            %v258 = vld [vmem:[%s234 + $0x58] sm:$0xff]
            %259 = vst [vmem:[%s235 + $0x58] sm:$0xff] %v258
            %v260 = vld [vmem:[%s234 + $0x60] sm:$0xff]
            %261 = vst [vmem:[%s235 + $0x60] sm:$0xff] %v260
            %v262 = vld [vmem:[%s234 + $0x68] sm:$0xff]
            %263 = vst [vmem:[%s235 + $0x68] sm:$0xff] %v262
            %v264 = vld [vmem:[%s234 + $0x70] sm:$0xff]
            %265 = vst [vmem:[%s235 + $0x70] sm:$0xff] %v264
          $region63: #{reverse.1} parent=57 // loop_footer
            %s233 = sadd.s32 1, %s229
          $region64: #{reverse.1} parent=57 // loop_footer_branch
            %228 = sbr.rel target = $region60
          $region65: #{reverse.1} parent=57 // loop_exit
            _
        $region58: #{reverse.1} parent=42 // pred_fallthru
          _
        // Predicated region
        $region66: #{reverse.1} parent=42 // pred_check
          _
        $region67: #{reverse.1} parent=42 // pred_check_branch
          %267 = sbr.rel target = $region69
        $region68: #{reverse.1} parent=42 // pred_region
          _
        $region69: #{reverse.1} parent=42 // pred_fallthru
          _
      $region43: #{reverse.1} parent=38 // pred_fallthru
        _
      // Predicated region
      $region44: #{reverse.1} parent=38 // pred_check
        _
      $region45: #{reverse.1} parent=38 // pred_check_branch
        %186 = sbr.rel target = $region47
      $region46: #{reverse.1} parent=38 // pred_region
        loop: start=0, step=1, limit=1
        $region48: #{reverse.1} parent=46 // loop_pre_header
          _
        $region49: #{reverse.1} parent=46 // loop_header
          %s189 = sphi 0, %s193
          %p190 = scmp.ge.s32.totalorder %s189, 1
          %s194 = sphi [#allocation1], [#allocation1]
          %s195 = sphi %s1, %s1
        $region50: #{reverse.1} parent=46 // loop_header_branch
          %192 = sbr.rel (%p190) target = $region54
        $region51: #{reverse.1} parent=46 // loop_body
          %v196 = vld [vmem:[%s194] sm:$0xff]
          %197 = vst [vmem:[%s195] sm:$0xff] %v196
          %v198 = vld [vmem:[%s194 + $0x8] sm:$0xff]
          %199 = vst [vmem:[%s195 + $0x8] sm:$0xff] %v198
          %v200 = vld [vmem:[%s194 + $0x10] sm:$0xff]
          %201 = vst [vmem:[%s195 + $0x10] sm:$0xff] %v200
          %v202 = vld [vmem:[%s194 + $0x18] sm:$0xff]
          %203 = vst [vmem:[%s195 + $0x18] sm:$0xff] %v202
          %v204 = vld [vmem:[%s194 + $0x20] sm:$0xff]
          %205 = vst [vmem:[%s195 + $0x20] sm:$0xff] %v204
          %v206 = vld [vmem:[%s194 + $0x28] sm:$0xff]
          %207 = vst [vmem:[%s195 + $0x28] sm:$0xff] %v206
          %v208 = vld [vmem:[%s194 + $0x30] sm:$0xff]
          %209 = vst [vmem:[%s195 + $0x30] sm:$0xff] %v208
          %v210 = vld [vmem:[%s194 + $0x38] sm:$0xff]
          %211 = vst [vmem:[%s195 + $0x38] sm:$0xff] %v210
          %v212 = vld [vmem:[%s194 + $0x40] sm:$0xff]
          %213 = vst [vmem:[%s195 + $0x40] sm:$0xff] %v212
          %v214 = vld [vmem:[%s194 + $0x48] sm:$0xff]
          %215 = vst [vmem:[%s195 + $0x48] sm:$0xff] %v214
          %v216 = vld [vmem:[%s194 + $0x50] sm:$0xff]
          %217 = vst [vmem:[%s195 + $0x50] sm:$0xff] %v216
          %v218 = vld [vmem:[%s194 + $0x58] sm:$0xff]
          %219 = vst [vmem:[%s195 + $0x58] sm:$0xff] %v218
          %v220 = vld [vmem:[%s194 + $0x60] sm:$0xff]
          %221 = vst [vmem:[%s195 + $0x60] sm:$0xff] %v220
          %v222 = vld [vmem:[%s194 + $0x68] sm:$0xff]
          %223 = vst [vmem:[%s195 + $0x68] sm:$0xff] %v222
          %v224 = vld [vmem:[%s194 + $0x70] sm:$0xff]
          %225 = vst [vmem:[%s195 + $0x70] sm:$0xff] %v224
        $region52: #{reverse.1} parent=46 // loop_footer
          %s193 = sadd.s32 1, %s189
        $region53: #{reverse.1} parent=46 // loop_footer_branch
          %188 = sbr.rel target = $region49
        $region54: #{reverse.1} parent=46 // loop_exit
          _
      $region47: #{reverse.1} parent=38 // pred_fallthru
        _
    $region39: #{reverse.1} parent=1 // pred_fallthru
      _
    %268 = vnop

// kernel: reverse
$region0: #{reverse}
  %s0 = inlined_call_operand.vmem [shape: f32[8,1,16], index: 0, kind: input, shape index: {}]
  %s1 = inlined_call_operand.vmem [shape: f32[8,1,16], index: 1, kind: output, shape index: {}]
  %v2 = vlaneseq
  %v3 = vsub.s32 15, %v2
  %4 = vset.pattern.permute.xlu0 %v3
  $region1: #{reverse} parent=0
    #allocation0 [shape = 'u8[4096]{0}', space=vmem, size = 0x1000, scoped, tag = 'operand span for operand 0']
    #allocation1 [shape = 'u8[4096]{0}', space=vmem, size = 0x1000, scoped, tag = 'operand span for operand 1']
    // Predicated region
    $region2: #{reverse} parent=1 // pred_check
      _
    $region3: #{reverse} parent=1 // pred_check_branch
      %6 = sbr.rel (0) target = $region5
    $region4: #{reverse} parent=1 // pred_region
      // Predicated region
      $region6: #{reverse} parent=4 // pred_check
        _
      $region7: #{reverse} parent=4 // pred_check_branch
        %8 = sbr.rel (0) target = $region9
      $region8: #{reverse} parent=4 // pred_region
        // Predicated region
        $region21: #{reverse} parent=8 // pred_check
          _
        $region22: #{reverse} parent=8 // pred_check_branch
          %23 = sbr.rel (0) target = $region24
        $region23: #{reverse} parent=8 // pred_region
          loop: start=0, step=1, limit=1
          $region25: #{reverse} parent=23 // loop_pre_header
            _
          $region26: #{reverse} parent=23 // loop_header
            %s25 = sphi 0, %s29
            %p26 = scmp.ge.s32.totalorder %s25, 1
            %s30 = sphi %s0, %s0
            %s31 = sphi [#allocation0], [#allocation0]
          $region27: #{reverse} parent=23 // loop_header_branch
            %28 = sbr.rel (%p26) target = $region31
          $region28: #{reverse} parent=23 // loop_body
            %v32 = vld [vmem:[%s30] sm:$0xff]
            %33 = vst [vmem:[%s31] sm:$0xff] %v32
          $region29: #{reverse} parent=23 // loop_footer
            %s29 = sadd.s32 1, %s25
          $region30: #{reverse} parent=23 // loop_footer_branch
            %24 = sbr.rel target = $region26
          $region31: #{reverse} parent=23 // loop_exit
            _
        $region24: #{reverse} parent=8 // pred_fallthru
          _
        // Predicated region
        $region32: #{reverse} parent=8 // pred_check
          _
        $region33: #{reverse} parent=8 // pred_check_branch
          %35 = sbr.rel target = $region35
        $region34: #{reverse} parent=8 // pred_region
          _
        $region35: #{reverse} parent=8 // pred_fallthru
          _
      $region9: #{reverse} parent=4 // pred_fallthru
        _
      // Predicated region
      $region10: #{reverse} parent=4 // pred_check
        _
      $region11: #{reverse} parent=4 // pred_check_branch
        %10 = sbr.rel target = $region13
      $region12: #{reverse} parent=4 // pred_region
        loop: start=0, step=1, limit=1
        $region14: #{reverse} parent=12 // loop_pre_header
          _
        $region15: #{reverse} parent=12 // loop_header
          %s13 = sphi 0, %s17
          %p14 = scmp.ge.s32.totalorder %s13, 1
          %s18 = sphi %s0, %s0
          %s19 = sphi [#allocation0], [#allocation0]
        $region16: #{reverse} parent=12 // loop_header_branch
          %16 = sbr.rel (%p14) target = $region20
        $region17: #{reverse} parent=12 // loop_body
          %v20 = vld [vmem:[%s18] sm:$0xff]
          %21 = vst [vmem:[%s19] sm:$0xff] %v20
        $region18: #{reverse} parent=12 // loop_footer
          %s17 = sadd.s32 1, %s13
        $region19: #{reverse} parent=12 // loop_footer_branch
          %12 = sbr.rel target = $region15
        $region20: #{reverse} parent=12 // loop_exit
          _
      $region13: #{reverse} parent=4 // pred_fallthru
        _
    $region5: #{reverse} parent=1 // pred_fallthru
      _
    %36 = vnop
    %v37 = vld [vmem:[#allocation0] sm:$0xff]
    %38 = vperm.xlu0 %4, %v37
    %v39 = vpop.permute.xlu0 %38
    %40 = vst [vmem:[#allocation1] sm:$0xff] %v39
    // Predicated region
    $region36: #{reverse} parent=1 // pred_check
      _
    $region37: #{reverse} parent=1 // pred_check_branch
      %42 = sbr.rel (0) target = $region39
    $region38: #{reverse} parent=1 // pred_region
      // Predicated region
      $region40: #{reverse} parent=38 // pred_check
        _
      $region41: #{reverse} parent=38 // pred_check_branch
        %44 = sbr.rel (0) target = $region43
      $region42: #{reverse} parent=38 // pred_region
        // Predicated region
        $region55: #{reverse} parent=42 // pred_check
          _
        $region56: #{reverse} parent=42 // pred_check_branch
          %59 = sbr.rel (0) target = $region58
        $region57: #{reverse} parent=42 // pred_region
          loop: start=0, step=1, limit=1
          $region59: #{reverse} parent=57 // loop_pre_header
            _
          $region60: #{reverse} parent=57 // loop_header
            %s61 = sphi 0, %s65
            %p62 = scmp.ge.s32.totalorder %s61, 1
            %s66 = sphi [#allocation1], [#allocation1]
            %s67 = sphi %s1, %s1
          $region61: #{reverse} parent=57 // loop_header_branch
            %64 = sbr.rel (%p62) target = $region65
          $region62: #{reverse} parent=57 // loop_body
            %v68 = vld [vmem:[%s66] sm:$0xff]
            %69 = vst [vmem:[%s67] sm:$0xff] %v68
          $region63: #{reverse} parent=57 // loop_footer
            %s65 = sadd.s32 1, %s61
          $region64: #{reverse} parent=57 // loop_footer_branch
            %60 = sbr.rel target = $region60
          $region65: #{reverse} parent=57 // loop_exit
            _
        $region58: #{reverse} parent=42 // pred_fallthru
          _
        // Predicated region
        $region66: #{reverse} parent=42 // pred_check
          _
        $region67: #{reverse} parent=42 // pred_check_branch
          %71 = sbr.rel target = $region69
        $region68: #{reverse} parent=42 // pred_region
          _
        $region69: #{reverse} parent=42 // pred_fallthru
          _
      $region43: #{reverse} parent=38 // pred_fallthru
        _
      // Predicated region
      $region44: #{reverse} parent=38 // pred_check
        _
      $region45: #{reverse} parent=38 // pred_check_branch
        %46 = sbr.rel target = $region47
      $region46: #{reverse} parent=38 // pred_region
        loop: start=0, step=1, limit=1
        $region48: #{reverse} parent=46 // loop_pre_header
          _
        $region49: #{reverse} parent=46 // loop_header
          %s49 = sphi 0, %s53
          %p50 = scmp.ge.s32.totalorder %s49, 1
          %s54 = sphi [#allocation1], [#allocation1]
          %s55 = sphi %s1, %s1
        $region50: #{reverse} parent=46 // loop_header_branch
          %52 = sbr.rel (%p50) target = $region54
        $region51: #{reverse} parent=46 // loop_body
          %v56 = vld [vmem:[%s54] sm:$0xff]
          %57 = vst [vmem:[%s55] sm:$0xff] %v56
        $region52: #{reverse} parent=46 // loop_footer
          %s53 = sadd.s32 1, %s49
        $region53: #{reverse} parent=46 // loop_footer_branch
          %48 = sbr.rel target = $region49
        $region54: #{reverse} parent=46 // loop_exit
          _
      $region47: #{reverse} parent=38 // pred_fallthru
        _
    $region39: #{reverse} parent=1 // pred_fallthru
      _
    %72 = vnop

// kernel: tile.13
$region0: #{tile.13}
  #allocation0 [shape = 's32[1]{0}', space=sflag, size = 0x4, scoped, tag = 'scoped memory for tile.13']
  %s0 = inlined_call_operand.vmem [shape: f32[32], index: 0, kind: input, shape index: {}]
  %s1 = inlined_call_operand.vmem [shape: f32[8,32], index: 1, kind: output, shape index: {}]
  // Predicated region
  $region2: #{tile.13} parent=0 // pred_check
    _
  $region3: #{tile.13} parent=0 // pred_check_branch
    %3 = sbr.rel (0) target = $region5
  $region4: #{tile.13} parent=0 // pred_region
    _
  $region5: #{tile.13} parent=0 // pred_fallthru
    _
  %v4 = vld [vmem:[%s0] ss:$0 sm:$0xff]
  %5 = vst [vmem:[%s1] sm:$0xff] %v4

// kernel: tile.14
$region0: #{tile.14}
  %s0 = inlined_call_operand.vmem [shape: f32[8,32], index: 0, kind: input, shape index: {}]
  %s1 = inlined_call_operand.vmem [shape: f32[1,256], index: 1, kind: output, shape index: {}]
  $region1: #{tile.14} parent=0
    #allocation0 [shape = 'u8[8192]{0}', space=vmem, size = 0x2000, scoped, tag = 'scoped mem for output reshape']
    %s2 = smov 3
    %v3 = vld [vmem:[%s0] ss:$4 sm:%s2]
    %vm4 = vcmask 261120
    %5 = vst.msk [vmem:[#allocation0] ss:$8 sm:$0x3] %vm4, %v3
    %s6 = scalar_lea.vmem %s0, 3
    %s7 = smov 3
    %v8 = vld [vmem:[%s6] ss:$4 sm:%s7]
    %9 = vrot.lane.b32.xlu0 %v8, 96
    %v10 = vpop.permute.xlu0 %9
    %vm11 = vcmask 1048320
    %12 = vst.msk [vmem:[#allocation0] ss:$8 sm:$0x3] %vm11, %v10
    %s13 = scalar_lea.vmem %s0, 2
    %s14 = smov 3
    %v15 = vld [vmem:[%s13] ss:$4 sm:%s14]
    %16 = vrot.lane.b32.xlu0 %v15, 64
    %v17 = vpop.permute.xlu0 %16
    %vm18 = vcmask 785920
    %19 = vst.msk [vmem:[#allocation0] ss:$8 sm:$0x3] %vm18, %v17
    %s20 = scalar_lea.vmem %s0, 1
    %s21 = smov 3
    %v22 = vld [vmem:[%s20] ss:$4 sm:%s21]
    %23 = vrot.lane.b32.xlu0 %v22, 32
    %v24 = vpop.permute.xlu0 %23
    %vm25 = vcmask 523520
    %26 = vst.msk [vmem:[#allocation0] ss:$8 sm:$0x3] %vm25, %v24
    %s28 = sshllo.u32 0, 1
    %v30 = vld [vmem:[#allocation0] sm:%s28]
    %s31 = sshllo.u32 0, 1
    %32 = vst [vmem:[%s1] sm:%s31] %v30
    %s33 = scalar_lea.vmem [#allocation0], 8
    %v34 = vld [vmem:[%s33] sm:%s28]
    %s35 = sshllo.u32 0, 1
    %s36 = scalar_lea.vmem %s1, 1
    %37 = vst [vmem:[%s36] sm:%s35] %v34

// kernel: tile.18
$region0: #{tile.18}
  #allocation0 [shape = 's32[1]{0}', space=sflag, size = 0x4, scoped, tag = 'scoped memory for tile.18']
  %s0 = inlined_call_operand.vmem [shape: f32[16], index: 0, kind: input, shape index: {}]
  %s1 = inlined_call_operand.vmem [shape: f32[8,16], index: 1, kind: output, shape index: {}]
  // Predicated region
  $region2: #{tile.18} parent=0 // pred_check
    _
  $region3: #{tile.18} parent=0 // pred_check_branch
    %3 = sbr.rel (0) target = $region5
  $region4: #{tile.18} parent=0 // pred_region
    _
  $region5: #{tile.18} parent=0 // pred_fallthru
    _
  %v4 = vld [vmem:[%s0] ss:$0 sm:$0xff]
  %5 = vst [vmem:[%s1] sm:$0xff] %v4

// kernel: tile.19
$region0: #{tile.19}
  %s0 = inlined_call_operand.vmem [shape: f32[8,16], index: 0, kind: input, shape index: {}]
  %s1 = inlined_call_operand.vmem [shape: f32[1,128], index: 1, kind: output, shape index: {}]
  $region1: #{tile.19} parent=0
    #allocation0 [shape = 'u8[4096]{0}', space=vmem, size = 0x1000, scoped, tag = 'scoped mem for output reshape']
    %v2 = vld [vmem:[%s0] sm:$0x1]
    %vm3 = vcmask 130048
    %4 = vst.msk [vmem:[#allocation0] sm:$0x1] %vm3, %v2
    %s5 = scalar_lea.vmem %s0, 7
    %v6 = vld [vmem:[%s5] sm:$0x1]
    %7 = vrot.lane.b32.xlu0 %v6, 112
    %v8 = vpop.permute.xlu0 %7
    %vm9 = vcmask 1048448
    %10 = vst.msk [vmem:[#allocation0] sm:$0x1] %vm9, %v8
    %s11 = scalar_lea.vmem %s0, 6
    %v12 = vld [vmem:[%s11] sm:$0x1]
    %13 = vrot.lane.b32.xlu0 %v12, 96
    %v14 = vpop.permute.xlu0 %13
    %vm15 = vcmask 917248
    %16 = vst.msk [vmem:[#allocation0] sm:$0x1] %vm15, %v14
    %s17 = scalar_lea.vmem %s0, 5
    %v18 = vld [vmem:[%s17] sm:$0x1]
    %19 = vrot.lane.b32.xlu0 %v18, 80
    %v20 = vpop.permute.xlu0 %19
    %vm21 = vcmask 786048
    %22 = vst.msk [vmem:[#allocation0] sm:$0x1] %vm21, %v20
    %s23 = scalar_lea.vmem %s0, 4
    %v24 = vld [vmem:[%s23] sm:$0x1]
    %25 = vrot.lane.b32.xlu0 %v24, 64
    %v26 = vpop.permute.xlu0 %25
    %vm27 = vcmask 654848
    %28 = vst.msk [vmem:[#allocation0] sm:$0x1] %vm27, %v26
    %s29 = scalar_lea.vmem %s0, 3
    %v30 = vld [vmem:[%s29] sm:$0x1]
    %31 = vrot.lane.b32.xlu0 %v30, 48
    %v32 = vpop.permute.xlu0 %31
    %vm33 = vcmask 523648
    %34 = vst.msk [vmem:[#allocation0] sm:$0x1] %vm33, %v32
    %s35 = scalar_lea.vmem %s0, 2
    %v36 = vld [vmem:[%s35] sm:$0x1]
    %37 = vrot.lane.b32.xlu0 %v36, 32
    %v38 = vpop.permute.xlu0 %37
    %vm39 = vcmask 392448
    %40 = vst.msk [vmem:[#allocation0] sm:$0x1] %vm39, %v38
    %s41 = scalar_lea.vmem %s0, 1
    %v42 = vld [vmem:[%s41] sm:$0x1]
    %43 = vrot.lane.b32.xlu0 %v42, 16
    %v44 = vpop.permute.xlu0 %43
    %vm45 = vcmask 261248
    %46 = vst.msk [vmem:[#allocation0] sm:$0x1] %vm45, %v44
    %s48 = sshllo.u32 0, 1
    %v50 = vld [vmem:[#allocation0] sm:%s48]
    %s51 = sshllo.u32 0, 1
    %52 = vst [vmem:[%s1] sm:%s51] %v50

// kernel: fourier_noise.1
$region0: #{fourier_noise.1}
  #allocation0 [shape = 'u32[]', space=smem, size = 0x4, offset = 0x4, fixed_abs, tag = 'smem constant byte address 0x4 - core index']
  #allocation1 [shape = 'u32[144,128]{1,0:T(1,128)}', space=vmem, size = 0x12000, scoped, tag = 'internal scratch']
  %s0 = inlined_call_operand.vmem [shape: f32[32,128], index: 0, kind: input, shape index: {}]
  %s1 = inlined_call_operand.vmem [shape: bf16[32,16], index: 1, kind: input, shape index: {}]
  %s2 = inlined_call_operand.vmem [shape: bf16[256,256], index: 2, kind: input, shape index: {}]
  %s3 = inlined_call_operand.vmem [shape: f32[1,256], index: 3, kind: input, shape index: {}]
  %s4 = inlined_call_operand.vmem [shape: bf16[256,128], index: 4, kind: input, shape index: {}]
  %s5 = inlined_call_operand.vmem [shape: f32[1,128], index: 5, kind: input, shape index: {}]
  %s6 = inlined_call_operand.vmem [shape: bf16[128,256], index: 6, kind: input, shape index: {}]
  %s7 = inlined_call_operand.vmem [shape: bf16[16,32], index: 7, kind: input, shape index: {}]
  %s8 = inlined_call_operand.vmem [shape: f32[16,128], index: 8, kind: output, shape index: {}]
  %s9 = sld [smem:[#allocation0]]
  $region42: #{fourier_noise.1} parent=0
    _
  %s11 = ssub.s32 1, %s9
  %s12 = scalar_select 0, %s11, %s9
  // Predicated region
  $region2: #{fourier_noise.1} parent=0 // pred_check
    _
  $region3: #{fourier_noise.1} parent=0 // pred_check_branch
    %14 = sbr.rel (0) target = $region5
  $region4: #{fourier_noise.1} parent=0 // pred_region
    _
  $region5: #{fourier_noise.1} parent=0 // pred_fallthru
    _
  // Predicated region
  $region6: #{fourier_noise.1} parent=0 // pred_check
    _
  $region7: #{fourier_noise.1} parent=0 // pred_check_branch
    %16 = sbr.rel (0) target = $region9
  $region8: #{fourier_noise.1} parent=0 // pred_region
    _
  $region9: #{fourier_noise.1} parent=0 // pred_fallthru
    _
  // Predicated region
  $region10: #{fourier_noise.1} parent=0 // pred_check
    _
  $region11: #{fourier_noise.1} parent=0 // pred_check_branch
    %18 = sbr.rel (0) target = $region13
  $region12: #{fourier_noise.1} parent=0 // pred_region
    _
  $region13: #{fourier_noise.1} parent=0 // pred_fallthru
    _
  // Predicated region
  $region14: #{fourier_noise.1} parent=0 // pred_check
    _
  $region15: #{fourier_noise.1} parent=0 // pred_check_branch
    %20 = sbr.rel (0) target = $region17
  $region16: #{fourier_noise.1} parent=0 // pred_region
    _
  $region17: #{fourier_noise.1} parent=0 // pred_fallthru
    _
  // Predicated region
  $region18: #{fourier_noise.1} parent=0 // pred_check
    _
  $region19: #{fourier_noise.1} parent=0 // pred_check_branch
    %22 = sbr.rel (0) target = $region21
  $region20: #{fourier_noise.1} parent=0 // pred_region
    _
  $region21: #{fourier_noise.1} parent=0 // pred_fallthru
    _
  // Predicated region
  $region22: #{fourier_noise.1} parent=0 // pred_check
    _
  $region23: #{fourier_noise.1} parent=0 // pred_check_branch
    %24 = sbr.rel (0) target = $region25
  $region24: #{fourier_noise.1} parent=0 // pred_region
    _
  $region25: #{fourier_noise.1} parent=0 // pred_fallthru
    _
  // Predicated region
  $region26: #{fourier_noise.1} parent=0 // pred_check
    _
  $region27: #{fourier_noise.1} parent=0 // pred_check_branch
    %26 = sbr.rel (0) target = $region29
  $region28: #{fourier_noise.1} parent=0 // pred_region
    _
  $region29: #{fourier_noise.1} parent=0 // pred_fallthru
    _
  // Predicated region
  $region30: #{fourier_noise.1} parent=0 // pred_check
    _
  $region31: #{fourier_noise.1} parent=0 // pred_check_branch
    %28 = sbr.rel (0) target = $region33
  $region32: #{fourier_noise.1} parent=0 // pred_region
    _
  $region33: #{fourier_noise.1} parent=0 // pred_fallthru
    _
  %v30 = vld [vmem:[%s0] sm:$0xff]
  %v31 = vld [vmem:[%s0 + $0x8] sm:$0xff]
  %v32 = vld [vmem:[%s0 + $0x10] sm:$0xff]
  %v33 = vld [vmem:[%s0 + $0x18] sm:$0xff]
  %v34 = vsub.f32 %v30, %v32
  %v35 = vsub.f32 %v31, %v33
  %v36 = vmul.f32 %v34, 0.5
  %v37 = vmul.f32 %v35, 0.5
  %v38 = vld [vmem:[%s1] sm:$0xf]
  %v39 = vld [vmem:[%s1 + $0x4] sm:$0xf]
  %v40 = vld [vmem:[%s1 + $0x8] sm:$0xf]
  %v41 = vld [vmem:[%s1 + $0xc] sm:$0xf]
  %v42 = vpack.c.bf16 %v31, %v30
  %v47 = vunpack.c.l.b16 %v38
  %v48 = vunpack.c.l.b16 %v39
  %v49 = vunpack.c.l.b16 %v40
  %v50 = vunpack.c.l.b16 %v41
  %v51 = vpack.c.b16 %v48, %v47
  %v52 = vpack.c.b16 %v50, %v49
  %vm53 = vcmask 130048
  %v55 = vsel %vm53, %v51, 0
  %v58 = vsel %vm53, %v52, 0
  %60 = vmatprep.subr.bf16.mxu0 0
  %61 = vmatpush1.bf16.msra.mxu0 %v42
  %62 = vmatprep.subr.bf16.mxu0 0
  %63 = vmatpush1.bf16.msra.mxu0 0
  %64 = vmatprep.subr.bf16.mxu0 0
  %65 = vmatpush1.bf16.msra.mxu0 0
  %66 = vmatprep.subr.bf16.mxu0 0
  %67 = vmatpush1.bf16.msra.mxu0 0
  %68 = vmatprep.subr.bf16.mxu0 0
  %69 = vmatpush1.bf16.msra.mxu0 0
  %70 = vmatprep.subr.bf16.mxu0 0
  %71 = vmatpush1.bf16.msra.mxu0 0
  %72 = vmatprep.subr.bf16.mxu0 0
  %73 = vmatpush1.bf16.msra.mxu0 0
  %74 = vmatprep.subr.bf16.mxu0 0
  %75 = vmatpush1.bf16.msra.mxu0 0
  %76 = vmatprep.subr.bf16.mxu0 0
  %77 = vmatpush1.bf16.msra.mxu0 0
  %78 = vmatprep.subr.bf16.mxu0 0
  %79 = vmatpush1.bf16.msra.mxu0 0
  %80 = vmatprep.subr.bf16.mxu0 0
  %81 = vmatpush1.bf16.msra.mxu0 0
  %82 = vmatprep.subr.bf16.mxu0 0
  %83 = vmatpush1.bf16.msra.mxu0 0
  %84 = vmatprep.subr.bf16.mxu0 0
  %85 = vmatpush1.bf16.msra.mxu0 0
  %86 = vmatprep.subr.bf16.mxu0 0
  %87 = vmatpush1.bf16.msra.mxu0 0
  %88 = vmatprep.subr.bf16.mxu0 0
  %89 = vmatpush1.bf16.msra.mxu0 0
  %90 = vmatprep.subr.bf16.mxu0 0
  %91 = vmatpush1.bf16.msra.mxu0 0
  %92 = vmatprep.mubr.bf16.mxu0 0
  %93 = vmatmul.mubr.bf16.gmra.mrb[0].mxu0 %v55
  %v94 = vpop.f32.mrb[0].mxu0
  %v95 = vadd.f32 0.0, %v94
  %v96 = vpop.f32.mrb[0].mxu0
  %v97 = vpop.f32.mrb[0].mxu0
  %v98 = vadd.f32 0.0, %v97
  %v99 = vpop.f32.mrb[0].mxu0
  %100 = vmatprep.mubr.bf16.mxu0 0
  %101 = vmatmul.mubr.bf16.gmra.mrb[0].mxu0 %v58
  %v102 = vpop.f32.mrb[0].mxu0
  %v103 = vadd.f32 0.0, %v102
  %v104 = vpop.f32.mrb[0].mxu0
  %v105 = vpop.f32.mrb[0].mxu0
  %v106 = vadd.f32 0.0, %v105
  %v107 = vpop.f32.mrb[0].mxu0
  %108 = vdwg.mxu0
  %v109 = vpack.c.bf16 %v98, %v95
  %v110 = vpack.c.bf16 %v106, %v103
  %v111 = vld [vmem:[%s2] sm:$0xff]
  %v112 = vld [vmem:[%s2 + $0x8] sm:$0xff]
  %v113 = vld [vmem:[%s2 + $0x10] sm:$0xff]
  %v114 = vld [vmem:[%s2 + $0x18] sm:$0xff]
  %v115 = vld [vmem:[%s2 + $0x20] sm:$0xff]
  %v116 = vld [vmem:[%s2 + $0x28] sm:$0xff]
  %v117 = vld [vmem:[%s2 + $0x30] sm:$0xff]
  %v118 = vld [vmem:[%s2 + $0x38] sm:$0xff]
  %v119 = vld [vmem:[%s2 + $0x40] sm:$0xff]
  %v120 = vld [vmem:[%s2 + $0x48] sm:$0xff]
  %v121 = vld [vmem:[%s2 + $0x50] sm:$0xff]
  %v122 = vld [vmem:[%s2 + $0x58] sm:$0xff]
  %v123 = vld [vmem:[%s2 + $0x60] sm:$0xff]
  %v124 = vld [vmem:[%s2 + $0x68] sm:$0xff]
  %v125 = vld [vmem:[%s2 + $0x70] sm:$0xff]
  %v126 = vld [vmem:[%s2 + $0x78] sm:$0xff]
  %v127 = vld [vmem:[%s2 + $0x80] sm:$0xff]
  %v128 = vld [vmem:[%s2 + $0x88] sm:$0xff]
  %v129 = vld [vmem:[%s2 + $0x90] sm:$0xff]
  %v130 = vld [vmem:[%s2 + $0x98] sm:$0xff]
  %v131 = vld [vmem:[%s2 + $0xa0] sm:$0xff]
  %v132 = vld [vmem:[%s2 + $0xa8] sm:$0xff]
  %v133 = vld [vmem:[%s2 + $0xb0] sm:$0xff]
  %v134 = vld [vmem:[%s2 + $0xb8] sm:$0xff]
  %v135 = vld [vmem:[%s2 + $0xc0] sm:$0xff]
  %v136 = vld [vmem:[%s2 + $0xc8] sm:$0xff]
  %v137 = vld [vmem:[%s2 + $0xd0] sm:$0xff]
  %v138 = vld [vmem:[%s2 + $0xd8] sm:$0xff]
  %v139 = vld [vmem:[%s2 + $0xe0] sm:$0xff]
  %v140 = vld [vmem:[%s2 + $0xe8] sm:$0xff]
  %v141 = vld [vmem:[%s2 + $0xf0] sm:$0xff]
  %v142 = vld [vmem:[%s2 + $0xf8] sm:$0xff]
  %v143 = vld [vmem:[%s3] sm:$0x3]
  %v145 = vlaneseq
  %v146 = vshrl.u32 %v145, 7
  %v147 = vsub.s32 0, %v146
  %v148 = vrot.slane %v143, %v147
  %v149 = vlaneseq
  %v150 = vshrl.u32 %v149, 7
  %v151 = vsub.s32 1, %v150
  %v152 = vrot.slane %v143, %v151
  %v187 = vunpack.c.l.b16 %v111
  %v188 = vunpack.c.h.b16 %v111
  %v189 = vunpack.c.l.b16 %v112
  %v190 = vunpack.c.h.b16 %v112
  %v191 = vunpack.c.l.b16 %v113
  %v192 = vunpack.c.h.b16 %v113
  %v193 = vunpack.c.l.b16 %v114
  %v194 = vunpack.c.h.b16 %v114
  %v195 = vunpack.c.l.b16 %v115
  %v196 = vunpack.c.h.b16 %v115
  %v197 = vunpack.c.l.b16 %v116
  %v198 = vunpack.c.h.b16 %v116
  %v199 = vunpack.c.l.b16 %v117
  %v200 = vunpack.c.h.b16 %v117
  %v201 = vunpack.c.l.b16 %v118
  %v202 = vunpack.c.h.b16 %v118
  %v203 = vunpack.c.l.b16 %v119
  %v204 = vunpack.c.h.b16 %v119
  %v205 = vunpack.c.l.b16 %v120
  %v206 = vunpack.c.h.b16 %v120
  %v207 = vunpack.c.l.b16 %v121
  %v208 = vunpack.c.h.b16 %v121
  %v209 = vunpack.c.l.b16 %v122
  %v210 = vunpack.c.h.b16 %v122
  %v211 = vunpack.c.l.b16 %v123
  %v212 = vunpack.c.h.b16 %v123
  %v213 = vunpack.c.l.b16 %v124
  %v214 = vunpack.c.h.b16 %v124
  %v215 = vunpack.c.l.b16 %v125
  %v216 = vunpack.c.h.b16 %v125
  %v217 = vunpack.c.l.b16 %v126
  %v218 = vunpack.c.h.b16 %v126
  %v219 = vunpack.c.l.b16 %v127
  %v220 = vunpack.c.h.b16 %v127
  %v221 = vunpack.c.l.b16 %v128
  %v222 = vunpack.c.h.b16 %v128
  %v223 = vunpack.c.l.b16 %v129
  %v224 = vunpack.c.h.b16 %v129
  %v225 = vunpack.c.l.b16 %v130
  %v226 = vunpack.c.h.b16 %v130
  %v227 = vunpack.c.l.b16 %v131
  %v228 = vunpack.c.h.b16 %v131
  %v229 = vunpack.c.l.b16 %v132
  %v230 = vunpack.c.h.b16 %v132
  %v231 = vunpack.c.l.b16 %v133
  %v232 = vunpack.c.h.b16 %v133
  %v233 = vunpack.c.l.b16 %v134
  %v234 = vunpack.c.h.b16 %v134
  %v235 = vunpack.c.l.b16 %v135
  %v236 = vunpack.c.h.b16 %v135
  %v237 = vunpack.c.l.b16 %v136
  %v238 = vunpack.c.h.b16 %v136
  %v239 = vunpack.c.l.b16 %v137
  %v240 = vunpack.c.h.b16 %v137
  %v241 = vunpack.c.l.b16 %v138
  %v242 = vunpack.c.h.b16 %v138
  %v243 = vunpack.c.l.b16 %v139
  %v244 = vunpack.c.h.b16 %v139
  %v245 = vunpack.c.l.b16 %v140
  %v246 = vunpack.c.h.b16 %v140
  %v247 = vunpack.c.l.b16 %v141
  %v248 = vunpack.c.h.b16 %v141
  %v249 = vunpack.c.l.b16 %v142
  %v250 = vunpack.c.h.b16 %v142
  %v251 = vpack.c.b16 %v189, %v187
  %v252 = vpack.c.b16 %v190, %v188
  %v253 = vpack.c.b16 %v193, %v191
  %v254 = vpack.c.b16 %v194, %v192
  %v255 = vpack.c.b16 %v197, %v195
  %v256 = vpack.c.b16 %v198, %v196
  %v257 = vpack.c.b16 %v201, %v199
  %v258 = vpack.c.b16 %v202, %v200
  %v259 = vpack.c.b16 %v205, %v203
  %v260 = vpack.c.b16 %v206, %v204
  %v261 = vpack.c.b16 %v209, %v207
  %v262 = vpack.c.b16 %v210, %v208
  %v263 = vpack.c.b16 %v213, %v211
  %v264 = vpack.c.b16 %v214, %v212
  %v265 = vpack.c.b16 %v217, %v215
  %v266 = vpack.c.b16 %v218, %v216
  %v267 = vpack.c.b16 %v221, %v219
  %v268 = vpack.c.b16 %v222, %v220
  %v269 = vpack.c.b16 %v225, %v223
  %v270 = vpack.c.b16 %v226, %v224
  %v271 = vpack.c.b16 %v229, %v227
  %v272 = vpack.c.b16 %v230, %v228
  %v273 = vpack.c.b16 %v233, %v231
  %v274 = vpack.c.b16 %v234, %v232
  %v275 = vpack.c.b16 %v237, %v235
  %v276 = vpack.c.b16 %v238, %v236
  %v277 = vpack.c.b16 %v241, %v239
  %v278 = vpack.c.b16 %v242, %v240
  %v279 = vpack.c.b16 %v245, %v243
  %v280 = vpack.c.b16 %v246, %v244
  %v281 = vpack.c.b16 %v249, %v247
  %v282 = vpack.c.b16 %v250, %v248
  %315 = vmatprep.subr.bf16.mxu0 %v252
  %316 = vmatpush1.bf16.msra.mxu0 %v251
  %317 = vmatprep.subr.bf16.mxu0 %v254
  %318 = vmatpush1.bf16.msra.mxu0 %v253
  %319 = vmatprep.subr.bf16.mxu0 %v256
  %320 = vmatpush1.bf16.msra.mxu0 %v255
  %321 = vmatprep.subr.bf16.mxu0 %v258
  %322 = vmatpush1.bf16.msra.mxu0 %v257
  %323 = vmatprep.subr.bf16.mxu0 %v260
  %324 = vmatpush1.bf16.msra.mxu0 %v259
  %325 = vmatprep.subr.bf16.mxu0 %v262
  %326 = vmatpush1.bf16.msra.mxu0 %v261
  %327 = vmatprep.subr.bf16.mxu0 %v264
  %328 = vmatpush1.bf16.msra.mxu0 %v263
  %329 = vmatprep.subr.bf16.mxu0 %v266
  %330 = vmatpush1.bf16.msra.mxu0 %v265
  %331 = vmatprep.subr.bf16.mxu0 %v268
  %332 = vmatpush1.bf16.msra.mxu0 %v267
  %333 = vmatprep.subr.bf16.mxu0 %v270
  %334 = vmatpush1.bf16.msra.mxu0 %v269
  %335 = vmatprep.subr.bf16.mxu0 %v272
  %336 = vmatpush1.bf16.msra.mxu0 %v271
  %337 = vmatprep.subr.bf16.mxu0 %v274
  %338 = vmatpush1.bf16.msra.mxu0 %v273
  %339 = vmatprep.subr.bf16.mxu0 %v276
  %340 = vmatpush1.bf16.msra.mxu0 %v275
  %341 = vmatprep.subr.bf16.mxu0 %v278
  %342 = vmatpush1.bf16.msra.mxu0 %v277
  %343 = vmatprep.subr.bf16.mxu0 %v280
  %344 = vmatpush1.bf16.msra.mxu0 %v279
  %345 = vmatprep.subr.bf16.mxu0 %v282
  %346 = vmatpush1.bf16.msra.mxu0 %v281
  %347 = vmatprep.mubr.bf16.mxu0 %v110
  %348 = vmatmul.mubr.bf16.gmra.mrb[0].mxu0 %v109
  %v349 = vpop.f32.mrb[0].mxu0
  %v350 = vadd.f32 %v148, %v349
  %v351 = vpop.f32.mrb[0].mxu0
  %v352 = vadd.f32 %v152, %v351
  %v353 = vpop.f32.mrb[0].mxu0
  %v354 = vadd.f32 %v148, %v353
  %v355 = vpop.f32.mrb[0].mxu0
  %v356 = vadd.f32 %v152, %v355
  %357 = vdwg.mxu0
  %v358 = vmax.f32 %v350, 0.0
  %v359 = vmax.f32 %v352, 0.0
  %v360 = vmax.f32 %v354, 0.0
  %v361 = vmax.f32 %v356, 0.0
  %v362 = vpack.c.bf16 %v360, %v358
  %v363 = vpack.c.bf16 %v361, %v359
  %v364 = vld [vmem:[%s4] sm:$0xf]
  %v365 = vld [vmem:[%s4 + $0x4] sm:$0xf]
  %v366 = vld [vmem:[%s4 + $0x8] sm:$0xf]
  %v367 = vld [vmem:[%s4 + $0xc] sm:$0xf]
  %v368 = vld [vmem:[%s4 + $0x10] sm:$0xf]
  %v369 = vld [vmem:[%s4 + $0x14] sm:$0xf]
  %v370 = vld [vmem:[%s4 + $0x18] sm:$0xf]
  %v371 = vld [vmem:[%s4 + $0x1c] sm:$0xf]
  %v372 = vld [vmem:[%s4 + $0x20] sm:$0xf]
  %v373 = vld [vmem:[%s4 + $0x24] sm:$0xf]
  %v374 = vld [vmem:[%s4 + $0x28] sm:$0xf]
  %v375 = vld [vmem:[%s4 + $0x2c] sm:$0xf]
  %v376 = vld [vmem:[%s4 + $0x30] sm:$0xf]
  %v377 = vld [vmem:[%s4 + $0x34] sm:$0xf]
  %v378 = vld [vmem:[%s4 + $0x38] sm:$0xf]
  %v379 = vld [vmem:[%s4 + $0x3c] sm:$0xf]
  %v380 = vld [vmem:[%s4 + $0x40] sm:$0xf]
  %v381 = vld [vmem:[%s4 + $0x44] sm:$0xf]
  %v382 = vld [vmem:[%s4 + $0x48] sm:$0xf]
  %v383 = vld [vmem:[%s4 + $0x4c] sm:$0xf]
  %v384 = vld [vmem:[%s4 + $0x50] sm:$0xf]
  %v385 = vld [vmem:[%s4 + $0x54] sm:$0xf]
  %v386 = vld [vmem:[%s4 + $0x58] sm:$0xf]
  %v387 = vld [vmem:[%s4 + $0x5c] sm:$0xf]
  %v388 = vld [vmem:[%s4 + $0x60] sm:$0xf]
  %v389 = vld [vmem:[%s4 + $0x64] sm:$0xf]
  %v390 = vld [vmem:[%s4 + $0x68] sm:$0xf]
  %v391 = vld [vmem:[%s4 + $0x6c] sm:$0xf]
  %v392 = vld [vmem:[%s4 + $0x70] sm:$0xf]
  %v393 = vld [vmem:[%s4 + $0x74] sm:$0xf]
  %v394 = vld [vmem:[%s4 + $0x78] sm:$0xf]
  %v395 = vld [vmem:[%s4 + $0x7c] sm:$0xf]
  %v396 = vld [vmem:[%s5] sm:$0x1]
  %v398 = vlaneseq
  %v399 = vshrl.u32 %v398, 7
  %v400 = vsub.s32 0, %v399
  %v401 = vrot.slane %v396, %v400
  %v435 = vunpack.c.l.b16 %v364
  %v436 = vunpack.c.l.b16 %v365
  %v437 = vunpack.c.l.b16 %v366
  %v438 = vunpack.c.l.b16 %v367
  %v439 = vunpack.c.l.b16 %v368
  %v440 = vunpack.c.l.b16 %v369
  %v441 = vunpack.c.l.b16 %v370
  %v442 = vunpack.c.l.b16 %v371
  %v443 = vunpack.c.l.b16 %v372
  %v444 = vunpack.c.l.b16 %v373
  %v445 = vunpack.c.l.b16 %v374
  %v446 = vunpack.c.l.b16 %v375
  %v447 = vunpack.c.l.b16 %v376
  %v448 = vunpack.c.l.b16 %v377
  %v449 = vunpack.c.l.b16 %v378
  %v450 = vunpack.c.l.b16 %v379
  %v451 = vunpack.c.l.b16 %v380
  %v452 = vunpack.c.l.b16 %v381
  %v453 = vunpack.c.l.b16 %v382
  %v454 = vunpack.c.l.b16 %v383
  %v455 = vunpack.c.l.b16 %v384
  %v456 = vunpack.c.l.b16 %v385
  %v457 = vunpack.c.l.b16 %v386
  %v458 = vunpack.c.l.b16 %v387
  %v459 = vunpack.c.l.b16 %v388
  %v460 = vunpack.c.l.b16 %v389
  %v461 = vunpack.c.l.b16 %v390
  %v462 = vunpack.c.l.b16 %v391
  %v463 = vunpack.c.l.b16 %v392
  %v464 = vunpack.c.l.b16 %v393
  %v465 = vunpack.c.l.b16 %v394
  %v466 = vunpack.c.l.b16 %v395
  %v467 = vpack.c.b16 %v436, %v435
  %v468 = vpack.c.b16 %v438, %v437
  %v469 = vpack.c.b16 %v440, %v439
  %v470 = vpack.c.b16 %v442, %v441
  %v471 = vpack.c.b16 %v444, %v443
  %v472 = vpack.c.b16 %v446, %v445
  %v473 = vpack.c.b16 %v448, %v447
  %v474 = vpack.c.b16 %v450, %v449
  %v475 = vpack.c.b16 %v452, %v451
  %v476 = vpack.c.b16 %v454, %v453
  %v477 = vpack.c.b16 %v456, %v455
  %v478 = vpack.c.b16 %v458, %v457
  %v479 = vpack.c.b16 %v460, %v459
  %v480 = vpack.c.b16 %v462, %v461
  %v481 = vpack.c.b16 %v464, %v463
  %v482 = vpack.c.b16 %v466, %v465
  %499 = vmatprep.subr.bf16.mxu0 0
  %500 = vmatpush1.bf16.msra.mxu0 %v467
  %501 = vmatprep.subr.bf16.mxu0 0
  %502 = vmatpush1.bf16.msra.mxu0 %v468
  %503 = vmatprep.subr.bf16.mxu0 0
  %504 = vmatpush1.bf16.msra.mxu0 %v469
  %505 = vmatprep.subr.bf16.mxu0 0
  %506 = vmatpush1.bf16.msra.mxu0 %v470
  %507 = vmatprep.subr.bf16.mxu0 0
  %508 = vmatpush1.bf16.msra.mxu0 %v471
  %509 = vmatprep.subr.bf16.mxu0 0
  %510 = vmatpush1.bf16.msra.mxu0 %v472
  %511 = vmatprep.subr.bf16.mxu0 0
  %512 = vmatpush1.bf16.msra.mxu0 %v473
  %513 = vmatprep.subr.bf16.mxu0 0
  %514 = vmatpush1.bf16.msra.mxu0 %v474
  %515 = vmatprep.subr.bf16.mxu0 0
  %516 = vmatpush1.bf16.msra.mxu0 %v475
  %517 = vmatprep.subr.bf16.mxu0 0
  %518 = vmatpush1.bf16.msra.mxu0 %v476
  %519 = vmatprep.subr.bf16.mxu0 0
  %520 = vmatpush1.bf16.msra.mxu0 %v477
  %521 = vmatprep.subr.bf16.mxu0 0
  %522 = vmatpush1.bf16.msra.mxu0 %v478
  %523 = vmatprep.subr.bf16.mxu0 0
  %524 = vmatpush1.bf16.msra.mxu0 %v479
  %525 = vmatprep.subr.bf16.mxu0 0
  %526 = vmatpush1.bf16.msra.mxu0 %v480
  %527 = vmatprep.subr.bf16.mxu0 0
  %528 = vmatpush1.bf16.msra.mxu0 %v481
  %529 = vmatprep.subr.bf16.mxu0 0
  %530 = vmatpush1.bf16.msra.mxu0 %v482
  %531 = vmatprep.mubr.bf16.mxu0 %v363
  %532 = vmatmul.mubr.bf16.gmra.mrb[0].mxu0 %v362
  %v533 = vpop.f32.mrb[0].mxu0
  %v534 = vadd.f32 %v401, %v533
  %v535 = vpop.f32.mrb[0].mxu0
  %v536 = vpop.f32.mrb[0].mxu0
  %v537 = vadd.f32 %v401, %v536
  %v538 = vpop.f32.mrb[0].mxu0
  %539 = vdwg.mxu0
  %v540 = vtanh.pop %v534
  %v541 = vtanh.pop %v537
  %v542 = vpack.c.bf16 %v541, %v540
  %v543 = vld [vmem:[%s6] sm:$0xff]
  %v544 = vld [vmem:[%s6 + $0x8] sm:$0xff]
  %v545 = vld [vmem:[%s6 + $0x10] sm:$0xff]
  %v546 = vld [vmem:[%s6 + $0x18] sm:$0xff]
  %v547 = vld [vmem:[%s6 + $0x20] sm:$0xff]
  %v548 = vld [vmem:[%s6 + $0x28] sm:$0xff]
  %v549 = vld [vmem:[%s6 + $0x30] sm:$0xff]
  %v550 = vld [vmem:[%s6 + $0x38] sm:$0xff]
  %v551 = vld [vmem:[%s6 + $0x40] sm:$0xff]
  %v552 = vld [vmem:[%s6 + $0x48] sm:$0xff]
  %v553 = vld [vmem:[%s6 + $0x50] sm:$0xff]
  %v554 = vld [vmem:[%s6 + $0x58] sm:$0xff]
  %v555 = vld [vmem:[%s6 + $0x60] sm:$0xff]
  %v556 = vld [vmem:[%s6 + $0x68] sm:$0xff]
  %v557 = vld [vmem:[%s6 + $0x70] sm:$0xff]
  %v558 = vld [vmem:[%s6 + $0x78] sm:$0xff]
  %v575 = vunpack.c.l.b16 %v543
  %v576 = vunpack.c.h.b16 %v543
  %v577 = vunpack.c.l.b16 %v544
  %v578 = vunpack.c.h.b16 %v544
  %v579 = vunpack.c.l.b16 %v545
  %v580 = vunpack.c.h.b16 %v545
  %v581 = vunpack.c.l.b16 %v546
  %v582 = vunpack.c.h.b16 %v546
  %v583 = vunpack.c.l.b16 %v547
  %v584 = vunpack.c.h.b16 %v547
  %v585 = vunpack.c.l.b16 %v548
  %v586 = vunpack.c.h.b16 %v548
  %v587 = vunpack.c.l.b16 %v549
  %v588 = vunpack.c.h.b16 %v549
  %v589 = vunpack.c.l.b16 %v550
  %v590 = vunpack.c.h.b16 %v550
  %v591 = vunpack.c.l.b16 %v551
  %v592 = vunpack.c.h.b16 %v551
  %v593 = vunpack.c.l.b16 %v552
  %v594 = vunpack.c.h.b16 %v552
  %v595 = vunpack.c.l.b16 %v553
  %v596 = vunpack.c.h.b16 %v553
  %v597 = vunpack.c.l.b16 %v554
  %v598 = vunpack.c.h.b16 %v554
  %v599 = vunpack.c.l.b16 %v555
  %v600 = vunpack.c.h.b16 %v555
  %v601 = vunpack.c.l.b16 %v556
  %v602 = vunpack.c.h.b16 %v556
  %v603 = vunpack.c.l.b16 %v557
  %v604 = vunpack.c.h.b16 %v557
  %v605 = vunpack.c.l.b16 %v558
  %v606 = vunpack.c.h.b16 %v558
  %v607 = vpack.c.b16 %v577, %v575
  %v608 = vpack.c.b16 %v578, %v576
  %v609 = vpack.c.b16 %v581, %v579
  %v610 = vpack.c.b16 %v582, %v580
  %v611 = vpack.c.b16 %v585, %v583
  %v612 = vpack.c.b16 %v586, %v584
  %v613 = vpack.c.b16 %v589, %v587
  %v614 = vpack.c.b16 %v590, %v588
  %v615 = vpack.c.b16 %v593, %v591
  %v616 = vpack.c.b16 %v594, %v592
  %v617 = vpack.c.b16 %v597, %v595
  %v618 = vpack.c.b16 %v598, %v596
  %v619 = vpack.c.b16 %v601, %v599
  %v620 = vpack.c.b16 %v602, %v600
  %v621 = vpack.c.b16 %v605, %v603
  %v622 = vpack.c.b16 %v606, %v604
  %639 = vmatprep.subr.bf16.mxu0 %v608
  %640 = vmatpush1.bf16.msra.mxu0 %v607
  %641 = vmatprep.subr.bf16.mxu0 %v610
  %642 = vmatpush1.bf16.msra.mxu0 %v609
  %643 = vmatprep.subr.bf16.mxu0 %v612
  %644 = vmatpush1.bf16.msra.mxu0 %v611
  %645 = vmatprep.subr.bf16.mxu0 %v614
  %646 = vmatpush1.bf16.msra.mxu0 %v613
  %647 = vmatprep.subr.bf16.mxu0 %v616
  %648 = vmatpush1.bf16.msra.mxu0 %v615
  %649 = vmatprep.subr.bf16.mxu0 %v618
  %650 = vmatpush1.bf16.msra.mxu0 %v617
  %651 = vmatprep.subr.bf16.mxu0 %v620
  %652 = vmatpush1.bf16.msra.mxu0 %v619
  %653 = vmatprep.subr.bf16.mxu0 %v622
  %654 = vmatpush1.bf16.msra.mxu0 %v621
  %655 = vmatprep.subr.bf16.mxu0 0
  %656 = vmatpush1.bf16.msra.mxu0 0
  %657 = vmatprep.subr.bf16.mxu0 0
  %658 = vmatpush1.bf16.msra.mxu0 0
  %659 = vmatprep.subr.bf16.mxu0 0
  %660 = vmatpush1.bf16.msra.mxu0 0
  %661 = vmatprep.subr.bf16.mxu0 0
  %662 = vmatpush1.bf16.msra.mxu0 0
  %663 = vmatprep.subr.bf16.mxu0 0
  %664 = vmatpush1.bf16.msra.mxu0 0
  %665 = vmatprep.subr.bf16.mxu0 0
  %666 = vmatpush1.bf16.msra.mxu0 0
  %667 = vmatprep.subr.bf16.mxu0 0
  %668 = vmatpush1.bf16.msra.mxu0 0
  %669 = vmatprep.subr.bf16.mxu0 0
  %670 = vmatpush1.bf16.msra.mxu0 0
  %671 = vmatprep.mubr.bf16.mxu0 0
  %672 = vmatmul.mubr.bf16.gmra.mrb[0].mxu0 %v542
  %v673 = vpop.f32.mrb[0].mxu0
  %v674 = vadd.f32 0.0, %v673
  %v675 = vpop.f32.mrb[0].mxu0
  %v676 = vadd.f32 0.0, %v675
  %v677 = vpop.f32.mrb[0].mxu0
  %v678 = vadd.f32 0.0, %v677
  %v679 = vpop.f32.mrb[0].mxu0
  %v680 = vadd.f32 0.0, %v679
  %681 = vdwg.mxu0
  %v682 = vpack.c.bf16 %v678, %v674
  %v683 = vpack.c.bf16 %v680, %v676
  %v684 = vld [vmem:[%s7] sm:$0xf]
  %v685 = vld [vmem:[%s7 + $0x4] sm:$0xf]
  %v688 = vunpack.c.l.b16 %v684
  %v689 = vunpack.c.l.b16 %v685
  %v690 = vpack.c.b16 %v689, %v688
  %vm691 = vcmask 261120
  %v693 = vsel %vm691, %v690, 0
  %695 = vmatprep.subr.bf16.mxu0 0
  %696 = vmatpush1.bf16.msra.mxu0 %v682
  %697 = vmatprep.subr.bf16.mxu0 0
  %698 = vmatpush1.bf16.msra.mxu0 %v683
  %699 = vmatprep.subr.bf16.mxu0 0
  %700 = vmatpush1.bf16.msra.mxu0 0
  %701 = vmatprep.subr.bf16.mxu0 0
  %702 = vmatpush1.bf16.msra.mxu0 0
  %703 = vmatprep.subr.bf16.mxu0 0
  %704 = vmatpush1.bf16.msra.mxu0 0
  %705 = vmatprep.subr.bf16.mxu0 0
  %706 = vmatpush1.bf16.msra.mxu0 0
  %707 = vmatprep.subr.bf16.mxu0 0
  %708 = vmatpush1.bf16.msra.mxu0 0
  %709 = vmatprep.subr.bf16.mxu0 0
  %710 = vmatpush1.bf16.msra.mxu0 0
  %711 = vmatprep.subr.bf16.mxu0 0
  %712 = vmatpush1.bf16.msra.mxu0 0
  %713 = vmatprep.subr.bf16.mxu0 0
  %714 = vmatpush1.bf16.msra.mxu0 0
  %715 = vmatprep.subr.bf16.mxu0 0
  %716 = vmatpush1.bf16.msra.mxu0 0
  %717 = vmatprep.subr.bf16.mxu0 0
  %718 = vmatpush1.bf16.msra.mxu0 0
  %719 = vmatprep.subr.bf16.mxu0 0
  %720 = vmatpush1.bf16.msra.mxu0 0
  %721 = vmatprep.subr.bf16.mxu0 0
  %722 = vmatpush1.bf16.msra.mxu0 0
  %723 = vmatprep.subr.bf16.mxu0 0
  %724 = vmatpush1.bf16.msra.mxu0 0
  %725 = vmatprep.subr.bf16.mxu0 0
  %726 = vmatpush1.bf16.msra.mxu0 0
  %727 = vmatprep.mubr.bf16.mxu0 0
  %728 = vmatmul.mubr.bf16.gmra.mrb[0].mxu0 %v693
  %v729 = vpop.f32.mrb[0].mxu0
  %v730 = vadd.f32 %v36, %v729
  %v731 = vpop.f32.mrb[0].mxu0
  %v732 = vpop.f32.mrb[0].mxu0
  %v733 = vadd.f32 %v37, %v732
  %v734 = vpop.f32.mrb[0].mxu0
  %735 = vdwg.mxu0
  %736 = vst [vmem:[%s8] sm:$0xff] %v730
  %737 = vst [vmem:[%s8 + $0x8] sm:$0xff] %v733
  // Predicated region
  $region34: #{fourier_noise.1} parent=0 // pred_check
    _
  $region35: #{fourier_noise.1} parent=0 // pred_check_branch
    %739 = sbr.rel (0) target = $region37
  $region36: #{fourier_noise.1} parent=0 // pred_region
    _
  $region37: #{fourier_noise.1} parent=0 // pred_fallthru
    _
  // Predicated region
  $region38: #{fourier_noise.1} parent=0 // pred_check
    _
  $region39: #{fourier_noise.1} parent=0 // pred_check_branch
    %741 = sbr.rel (0) target = $region41
  $region40: #{fourier_noise.1} parent=0 // pred_region
    _
  $region41: #{fourier_noise.1} parent=0 // pred_fallthru
    _

</llo_original>
